<compile_context>
chip_gen: v7x
topology: tpu7x:2x2x1
jax: 0.10.0
libtpu: 0.0.40
codegen_flags: <defaults>
</compile_context>

<pallas_src>
import jax
import jax.numpy as jnp
from jax.experimental import pallas as pl
from jax.experimental.pallas import tpu as pltpu

NUM_CLASSES = 10   # small, deterministic stand-in for the default 1000
BN_EPS = 1e-5


# ----------------------------- Pallas kernels ------------------------------

def _make_conv_kernel(apply_relu: bool, has_residual: bool):
  """Fused im2col-matmul conv + folded-BN bias (+ residual add) (+ ReLU)."""
  if has_residual:
    def kernel(p_ref, w_ref, b_ref, r_ref, o_ref):
      acc = jnp.dot(p_ref[...], w_ref[...],
                    preferred_element_type=jnp.float32)         # bf16 MXU, f32 acc
      acc = acc + b_ref[...] + r_ref[...].astype(jnp.float32)
      if apply_relu:
        acc = jnp.maximum(acc, 0.0)
      o_ref[...] = acc.astype(o_ref.dtype)                      # single contiguous store
  else:
    def kernel(p_ref, w_ref, b_ref, o_ref):
      acc = jnp.dot(p_ref[...], w_ref[...],
                    preferred_element_type=jnp.float32)
      acc = acc + b_ref[...]
      if apply_relu:
        acc = jnp.maximum(acc, 0.0)
      o_ref[...] = acc.astype(o_ref.dtype)
  return kernel


def _head_kernel(x_ref, w_ref, b_ref, o_ref):
  # F.avg_pool2d(x, 7) on a 7x7 map == mean over the 49 spatial positions,
  # then the fully-connected layer (matmul + bias).
  pooled = jnp.mean(x_ref[...].astype(jnp.float32), axis=1)                 # (N, C)
  o_ref[...] = jnp.dot(pooled, w_ref[...],
                       preferred_element_type=jnp.float32) + b_ref[...]


# ----------------------------- JAX glue (layout) ----------------------------

def _extract_patches(x, kh, kw, stride, pad):
  """im2col: (N,H,W,C) -> (N*Ho*Wo, kh*kw*C).  Pure data-layout glue (bf16)."""
  n, h, w, c = x.shape
  if pad:
    x = jnp.pad(x, ((0, 0), (pad, pad), (pad, pad), (0, 0)))
  ho = (h + 2 * pad - kh) // stride + 1
  wo = (w + 2 * pad - kw) // stride + 1
  taps = []
  for i in range(kh):
    for j in range(kw):
      taps.append(x[:, i:i + stride * ho:stride, j:j + stride * wo:stride, :])
  p = jnp.stack(taps, axis=3)                       # (N, Ho, Wo, kh*kw, C)
  return p.reshape(n * ho * wo, kh * kw * c), ho, wo


def _choose_tile_m(m):
  """Largest multiple-of-8 tile <= 256 that divides m; else the full extent."""
  t = min(256, (m // 8) * 8)
  while t >= 8:
    if m % t == 0:
      return t
    t -= 8
  return m   # full-extent block (legal even when m is not 8-aligned)


def conv_bn_pallas(x, w, bias, *, stride, pad, residual=None, relu=True):
  """conv2d (no bias, BN-scale folded into w) + bias (+ residual) (+ ReLU)."""
  n = x.shape[0]
  kh, kw, cin, cout = w.shape
  patches, ho, wo = _extract_patches(x, kh, kw, stride, pad)     # (M, K) bf16
  m, k = patches.shape
  w2 = w.reshape(k, cout)                                        # bf16, folded
  tile_m = _choose_tile_m(m)
  grid = (m // tile_m,)

  in_specs = [
      pl.BlockSpec((tile_m, k), lambda i: (i, 0)),               # M-tiled patches
      pl.BlockSpec((k, cout), lambda i: (0, 0)),                 # weight (resident)
      pl.BlockSpec((1, cout), lambda i: (0, 0)),                 # folded-BN bias
  ]
  args = [patches, w2, bias]
  if residual is not None:
    in_specs.append(pl.BlockSpec((tile_m, cout), lambda i: (i, 0)))
    args.append(residual.reshape(m, cout))

  # Size the VMEM budget from the actual residency (generation-aware enough to
  # stay well within v7x's 64 MiB while lifting the default scoped cap).
  patch_bytes = tile_m * k * patches.dtype.itemsize
  out_bytes = tile_m * cout * 2                                  # bf16 output tile
  res_bytes = out_bytes if residual is not None else 0
  resident = 2 * (w2.size * w2.dtype.itemsize + cout * 4)
  est = resident + 2 * (patch_bytes + out_bytes + res_bytes)
  vmem_limit = int(min(max(2 * est + (4 << 20), 16 << 20), 48 << 20))

  out = pl.pallas_call(
      _make_conv_kernel(relu, residual is not None),
      out_shape=jax.ShapeDtypeStruct((m, cout), jnp.bfloat16),
      grid=grid,
      in_specs=in_specs,
      out_specs=pl.BlockSpec((tile_m, cout), lambda i: (i, 0)),
      compiler_params=pltpu.CompilerParams(
          dimension_semantics=("parallel",),      # shards M tiles across TCs (v7x)
          vmem_limit_bytes=vmem_limit),
  )(*args)
  return out.reshape(n, ho, wo, cout)


def head_pallas(x, fc_w, fc_b):
  """avg_pool2d(7) + flatten + Linear, fused in one Pallas kernel."""
  n, h, w, c = x.shape
  vmem = pl.BlockSpec(memory_space=pltpu.MemorySpace.VMEM)
  return pl.pallas_call(
      _head_kernel,
      out_shape=jax.ShapeDtypeStruct((n, fc_w.shape[-1]), jnp.float32),
      in_specs=[vmem, vmem, vmem],
      out_specs=vmem,
  )(x.reshape(n, h * w, c), fc_w, fc_b.reshape(1, -1))


# ----------------------------- model definition -----------------------------

def _make_bn(key, c):
  # BatchNorm in inference mode: fold (gamma, beta, running stats) into
  # per-channel scale/bias.  (Deterministically randomized synthetic params.)
  k1, k2, k3, k4 = jax.random.split(key, 4)
  gamma = 1.0 + 0.1 * jax.random.normal(k1, (c,))
  beta = 0.1 * jax.random.normal(k2, (c,))
  mean = 0.1 * jax.random.normal(k3, (c,))
  var = 1.0 + 0.1 * jnp.abs(jax.random.normal(k4, (c,)))
  scale = gamma / jnp.sqrt(var + BN_EPS)
  bias = beta - mean * scale
  return scale.astype(jnp.float32), bias.astype(jnp.float32)


def _make_conv_weight(key, kh, kw, cin, cout):
  std = (2.0 / (kh * kw * cin)) ** 0.5
  return (std * jax.random.normal(key, (kh, kw, cin, cout))).astype(jnp.float32)


def _fold_scale(w, scale):
  # conv(x, w) * scale == conv(x, w * scale): fold BN scale into the weight
  # columns and cast to bf16 for the MXU.
  return (w * scale.reshape(1, 1, 1, -1)).astype(jnp.bfloat16)


def _make_block_params(key, cin, cout, stride, has_shortcut):
  keys = jax.random.split(key, 6)
  s1, b1 = _make_bn(keys[1], cout)
  s2, b2 = _make_bn(keys[3], cout)
  p = {"stride": stride,
       "w1": _fold_scale(_make_conv_weight(keys[0], 3, 3, cin, cout), s1),
       "b1": b1.reshape(1, cout),
       "w2": _fold_scale(_make_conv_weight(keys[2], 3, 3, cout, cout), s2),
       "b2": b2.reshape(1, cout)}
  if has_shortcut:
    ss, bs = _make_bn(keys[5], cout)
    p["ws"] = _fold_scale(_make_conv_weight(keys[4], 1, 1, cin, cout), ss)
    p["bs"] = bs.reshape(1, cout)
  return p


def build_params(key):
  p = {}
  key, k = jax.random.split(key)
  p["bn0_scale"], p["bn0_bias"] = _make_bn(k, 1)          # nn.BatchNorm2d(1)
  layer_cfg = [
      ("layer1", 1, 64, 2, 1),     # _make_layer(1,   64, 2)
      ("layer2", 64, 128, 3, 1),   # _make_layer(64, 128, 3)
      ("layer3", 128, 256, 2, 2),  # _make_layer(128,256, 2, stride=2)
      ("layer4", 256, 512, 2, 2),  # _make_layer(256,512, 2, stride=2)
  ]
  for name, cin, cout, nblocks, stride in layer_cfg:
    blocks = []
    key, k = jax.random.split(key)
    blocks.append(_make_block_params(k, cin, cout, stride, True))
    for _ in range(1, nblocks):
      key, k = jax.random.split(key)
      blocks.append(_make_block_params(k, cout, cout, 1, False))
    p[name] = blocks
  key, kw_, kb_ = jax.random.split(key, 3)
  p["fc_w"] = (0.02 * jax.random.normal(kw_, (512, NUM_CLASSES))).astype(jnp.float32)
  p["fc_b"] = (0.02 * jax.random.normal(kb_, (NUM_CLASSES,))).astype(jnp.float32)
  return p


def residual_block(x, bp):
  stride = bp["stride"]
  # left branch: conv3x3(s) -> BN -> ReLU -> conv3x3(1) -> BN
  h = conv_bn_pallas(x, bp["w1"], bp["b1"], stride=stride, pad=1, relu=True)
  # right branch: identity, or conv1x1(s) -> BN for the first block of a layer
  if "ws" in bp:
    r = conv_bn_pallas(x, bp["ws"], bp["bs"], stride=stride, pad=0, relu=False)
  else:
    r = x
  # second conv + BN + residual add + final ReLU, fused in one kernel
  return conv_bn_pallas(h, bp["w2"], bp["b2"], stride=1, pad=1,
                        residual=r, relu=True)


def resnet_forward(x_nchw, params):
  # NCHW (PyTorch convention) -> NHWC for the kernels.
  x = jnp.transpose(x_nchw, (0, 2, 3, 1)).astype(jnp.float32)
  # Input BatchNorm2d(1): single-channel elementwise affine (trivial glue),
  # then drop to bf16 for all inter-layer activations / MXU operands.
  x = (x * params["bn0_scale"] + params["bn0_bias"]).astype(jnp.bfloat16)
  for name in ("layer1", "layer2", "layer3", "layer4"):
    for bp in params[name]:
      x = residual_block(x, bp)
  # x is now (N, 7, 7, 512); avg_pool2d(7) + flatten + fc in one kernel.
  return head_pallas(x, params["fc_w"], params["fc_b"])


if __name__ == "__main__":
  root = jax.random.PRNGKey(0)
  kp, kx = jax.random.split(root)
  params = build_params(kp)
  # 28x28 single-channel input (the smallest spatial size consistent with
  # BatchNorm2d(1), two stride-2 stages, and avg_pool2d(kernel=7)).
  x = jax.random.normal(kx, (2, 1, 28, 28), dtype=jnp.float32)
  logits = resnet_forward(x, params)
  logits = jax.block_until_ready(logits)
  assert logits.shape == (2, NUM_CLASSES), logits.shape
  assert bool(jnp.all(jnp.isfinite(logits)))
  print("KERNEL_OK")
</pallas_src>

<mosaic_0001>
module attributes {stable_mosaic.version = 11 : i64} {
  func.func @kernel(%arg0: i32, %arg1: memref<224x9xbf16, #tpu.memory_space<vmem>>, %arg2: memref<9x64xbf16, #tpu.memory_space<vmem>>, %arg3: memref<1x64xf32, #tpu.memory_space<vmem>>, %arg4: memref<224x64xbf16, #tpu.memory_space<vmem>>) attributes {dimension_semantics = [#tpu.dimension_semantics<parallel>], iteration_bounds = array<i64: 7>, scalar_prefetch = 0 : i64, scratch_operands = 0 : i64, tpu.core_type = #tpu.core_type<tc>, window_params = [{transform_indices = @transform_0, window_bounds = array<i64: 224, 9>}, {pipeline_mode = #tpu.pipeline_mode<synchronous>, transform_indices = @transform_1, window_bounds = array<i64: 9, 64>}, {pipeline_mode = #tpu.pipeline_mode<synchronous>, transform_indices = @transform_2, window_bounds = array<i64: 1, 64>}, {transform_indices = @transform_3, window_bounds = array<i64: 224, 64>}]} {
    %c0 = arith.constant 0 : index
    %c0_0 = arith.constant 0 : index
    %0 = vector.load %arg1[%c0, %c0_0] : memref<224x9xbf16, #tpu.memory_space<vmem>>, vector<224x9xbf16>
    %c0_1 = arith.constant 0 : index
    %c0_2 = arith.constant 0 : index
    %1 = vector.load %arg2[%c0_1, %c0_2] : memref<9x64xbf16, #tpu.memory_space<vmem>>, vector<9x64xbf16>
    %cst = arith.constant dense<0.000000e+00> : vector<224x64xf32>
    %2 = tpu.matmul %0, %1, %cst {dimension_numbers = #tpu.dot_dimension_numbers<[1], [0], [0], [1], [0, 0, 1, 1], [], []>} : vector<224x9xbf16>, vector<9x64xbf16>, vector<224x64xf32> -> vector<224x64xf32>
    %c0_3 = arith.constant 0 : index
    %c0_4 = arith.constant 0 : index
    %3 = vector.load %arg3[%c0_3, %c0_4] : memref<1x64xf32, #tpu.memory_space<vmem>>, vector<1x64xf32>
    %4 = vector.broadcast %3 : vector<1x64xf32> to vector<224x64xf32>
    %5 = arith.addf %2, %4 : vector<224x64xf32>
    %cst_5 = arith.constant 0.000000e+00 : f32
    %6 = vector.broadcast %cst_5 : f32 to vector<224x64xf32>
    %7 = arith.maximumf %5, %6 : vector<224x64xf32>
    %8 = arith.truncf %7 : vector<224x64xf32> to vector<224x64xbf16>
    %c0_6 = arith.constant 0 : index
    %c0_7 = arith.constant 0 : index
    %9 = vector.load %arg4[%c0_6, %c0_7] : memref<224x64xbf16, #tpu.memory_space<vmem>>, vector<224x64xbf16>
    tpu.vector_store %arg4[%c0_6, %c0_7], %8 {strides = array<i32>} : memref<224x64xbf16, #tpu.memory_space<vmem>>, vector<224x64xbf16>,
    return
  }
  func.func @transform_0(%arg0: i32) -> (i32, i32) {
    %c0_i32 = arith.constant 0 : i32
    %c0_i32_0 = arith.constant 0 : i32
    return %arg0, %c0_i32 : i32, i32
  }
  func.func @transform_1(%arg0: i32) -> (i32, i32) {
    %c0_i32 = arith.constant 0 : i32
    %c0_i32_0 = arith.constant 0 : i32
    %c0_i32_1 = arith.constant 0 : i32
    return %c0_i32, %c0_i32_0 : i32, i32
  }
  func.func @transform_2(%arg0: i32) -> (i32, i32) {
    %c0_i32 = arith.constant 0 : i32
    %c0_i32_0 = arith.constant 0 : i32
    %c0_i32_1 = arith.constant 0 : i32
    return %c0_i32, %c0_i32_0 : i32, i32
  }
  func.func @transform_3(%arg0: i32) -> (i32, i32) {
    %c0_i32 = arith.constant 0 : i32
    %c0_i32_0 = arith.constant 0 : i32
    return %arg0, %c0_i32 : i32, i32
  }
}

</mosaic_0001>

<llo_original>
// kernel: tpu_custom_call.1
$region0: #{tpu_custom_call.1}
  #allocation0 [shape = 'u32[]', space=smem, size = 0x4, offset = 0x4, fixed_abs, tag = 'smem constant byte address 0x4 - core index']
  #allocation1 [shape = 'u32[144,128]{1,0:T(1,128)}', space=vmem, size = 0x12000, scoped, tag = 'internal scratch']
  %s0 = inlined_call_operand.vmem [shape: bf16[1568,9], index: 0, kind: input, shape index: {}]
  %s1 = inlined_call_operand.vmem [shape: bf16[9,64], index: 1, kind: input, shape index: {}]
  %s2 = inlined_call_operand.vmem [shape: f32[1,64], index: 2, kind: input, shape index: {}]
  %s3 = inlined_call_operand.vmem [shape: bf16[1568,64], index: 3, kind: output, shape index: {}]
  %s4 = sld [smem:[#allocation0]]
  $region45: #{tpu_custom_call.1} parent=0
    _
  %s6 = ssub.s32 1, %s4
  %s7 = scalar_select 0, %s6, %s4
  loop: start=0, step=1, limit=9
  $region2: #{tpu_custom_call.1} parent=0 // loop_pre_header
    _
  $region3: #{tpu_custom_call.1} parent=0 // loop_header
    %s9 = sphi 0, %s13
    %p10 = scmp.ge.s32.totalorder %s9, 9
    %s19 = sphi 0, %s21
    %s22 = sphi 0, %s19
    %s23 = sphi 0, %s22
    %s39 = sphi 0, %s23
    %s43 = sphi 0, %s43
    %s45 = sphi 0, %s43
    %s46 = sphi 0, %s45
    %s60 = sphi 0, %s46
    %s64 = sphi 0, %s64
    %s66 = sphi 0, %s64
    %s67 = sphi 0, %s66
    %s81 = sphi 0, %s67
    %s87 = sphi 0, %s89
    %s90 = sphi 0, %s87
    %s91 = sphi 0, %s90
    %s107 = sphi 0, %s91
  $region4: #{tpu_custom_call.1} parent=0 // loop_header_branch
    %12 = sbr.rel (%p10) target = $region8
  $region5: #{tpu_custom_call.1} parent=0 // loop_body
    %s14 = ssub.s32 %s9, 1
    %s15 = ssub.s32 %s9, 2
    %s16 = sadd.s32 %s9, 1
    %s17 = ssub.s32 %s9, %s16
    %p18 = scmp.eq.s32.totalorder %s17, 0
    %s20 = sadd.s32 %s19, 1
    %s21 = scalar_select %p18, %s19, %s20
    %p24 = pneg %p18
    %p25 = scmp.eq.s32.totalorder %s9, 6
    %p26 = por %p24, %p25
    %p27 = scmp.ne.s32.totalorder %s19, %s22
    %p28 = scmp.eq.s32.totalorder %s9, 0
    %p29 = por %p27, %p28
    %p30 = scmp.ne.s32.totalorder %s19, %s22
    %p31 = scmp.eq.s32.totalorder %s14, 6
    %p32 = por %p30, %p31
    %p33 = scmp.ne.s32.totalorder %s22, %s23
    %p34 = scmp.eq.s32.totalorder %s14, 0
    %p35 = por %p33, %p34
    %p36 = scmp.ne.s32.totalorder %s22, %s23
    %p37 = scmp.eq.s32.totalorder %s15, 6
    %p38 = por %p36, %p37
    %p40 = scmp.ne.s32.totalorder %s23, %s39
    %p41 = scmp.eq.s32.totalorder %s15, 0
    %p42 = por %p40, %p41
    %s44 = sadd.s32 %s43, 1
    %p47 = scmp.eq.s32.totalorder %s9, 6
    %p48 = scmp.ne.s32.totalorder %s43, %s45
    %p49 = scmp.eq.s32.totalorder %s9, 0
    %p50 = por %p48, %p49
    %p51 = scmp.ne.s32.totalorder %s43, %s45
    %p52 = scmp.eq.s32.totalorder %s14, 6
    %p53 = por %p51, %p52
    %p54 = scmp.ne.s32.totalorder %s45, %s46
    %p55 = scmp.eq.s32.totalorder %s14, 0
    %p56 = por %p54, %p55
    %p57 = scmp.ne.s32.totalorder %s45, %s46
    %p58 = scmp.eq.s32.totalorder %s15, 6
    %p59 = por %p57, %p58
    %p61 = scmp.ne.s32.totalorder %s46, %s60
    %p62 = scmp.eq.s32.totalorder %s15, 0
    %p63 = por %p61, %p62
    %s65 = sadd.s32 %s64, 1
    %p68 = scmp.eq.s32.totalorder %s9, 6
    %p69 = scmp.ne.s32.totalorder %s64, %s66
    %p70 = scmp.eq.s32.totalorder %s9, 0
    %p71 = por %p69, %p70
    %p72 = scmp.ne.s32.totalorder %s64, %s66
    %p73 = scmp.eq.s32.totalorder %s14, 6
    %p74 = por %p72, %p73
    %p75 = scmp.ne.s32.totalorder %s66, %s67
    %p76 = scmp.eq.s32.totalorder %s14, 0
    %p77 = por %p75, %p76
    %p78 = scmp.ne.s32.totalorder %s66, %s67
    %p79 = scmp.eq.s32.totalorder %s15, 6
    %p80 = por %p78, %p79
    %p82 = scmp.ne.s32.totalorder %s67, %s81
    %p83 = scmp.eq.s32.totalorder %s15, 0
    %p84 = por %p82, %p83
    %s85 = ssub.s32 %s9, %s16
    %p86 = scmp.eq.s32.totalorder %s85, 0
    %s88 = sadd.s32 %s87, 1
    %s89 = scalar_select %p86, %s87, %s88
    %p92 = pneg %p86
    %p93 = scmp.eq.s32.totalorder %s9, 6
    %p94 = por %p92, %p93
    %p95 = scmp.ne.s32.totalorder %s87, %s90
    %p96 = scmp.eq.s32.totalorder %s9, 0
    %p97 = por %p95, %p96
    %p98 = scmp.ne.s32.totalorder %s87, %s90
    %p99 = scmp.eq.s32.totalorder %s14, 6
    %p100 = por %p98, %p99
    %p101 = scmp.ne.s32.totalorder %s90, %s91
    %p102 = scmp.eq.s32.totalorder %s14, 0
    %p103 = por %p101, %p102
    %p104 = scmp.ne.s32.totalorder %s90, %s91
    %p105 = scmp.eq.s32.totalorder %s15, 6
    %p106 = por %p104, %p105
    %p108 = scmp.ne.s32.totalorder %s91, %s107
    %p109 = scmp.eq.s32.totalorder %s15, 0
    %p110 = por %p108, %p109
    %p111 = scmp.le.s32.totalorder 1, %s9
    %p112 = scmp.lt.s32.totalorder %s9, 8
    %p113 = pnand %p111, %p112
    %p114 = pneg %p113
    // Predicated region
    $region9: #{tpu_custom_call.1} parent=5 // pred_check
      _
    $region10: #{tpu_custom_call.1} parent=5 // pred_check_branch
      %116 = sbr.rel (%p113) target = $region12
    $region11: #{tpu_custom_call.1} parent=5 // pred_region
      %s117 = ssub.s32 %s9, 1
      // Predicated region
      $region13: #{tpu_custom_call.1} parent=11 // pred_check
        %p118 = pneg %p56
      $region14: #{tpu_custom_call.1} parent=11 // pred_check_branch
        %120 = sbr.rel (%p118) target = $region16
      $region15: #{tpu_custom_call.1} parent=11 // pred_region
        _
      $region16: #{tpu_custom_call.1} parent=11 // pred_fallthru
        _
      // Predicated region
      $region17: #{tpu_custom_call.1} parent=11 // pred_check
        %p121 = pneg %p77
      $region18: #{tpu_custom_call.1} parent=11 // pred_check_branch
        %123 = sbr.rel (%p121) target = $region20
      $region19: #{tpu_custom_call.1} parent=11 // pred_region
        _
      $region20: #{tpu_custom_call.1} parent=11 // pred_fallthru
        _
    $region12: #{tpu_custom_call.1} parent=5 // pred_fallthru
      _
    %p124 = scmp.lt.s32.totalorder %s9, 7
    // Predicated region
    $region21: #{tpu_custom_call.1} parent=5 // pred_check
      %p125 = pneg %p124
    $region22: #{tpu_custom_call.1} parent=5 // pred_check_branch
      %127 = sbr.rel (%p125) target = $region24
    $region23: #{tpu_custom_call.1} parent=5 // pred_region
      // Predicated region
      $region25: #{tpu_custom_call.1} parent=23 // pred_check
        %p128 = pneg %p29
      $region26: #{tpu_custom_call.1} parent=23 // pred_check_branch
        %130 = sbr.rel (%p128) target = $region28
      $region27: #{tpu_custom_call.1} parent=23 // pred_region
        %s131 = smul.u32 28, %s9
        %p132 = scmp.lt.s32.totalorder %s131, 195
        %s133 = scalar_select %p132, %s131, 195
        %s134 = smul.addr %s133, 4
        %s135 = scalar_lea.vmem %s0, %s134
        %s136 = smul.u32 28, %s9
      $region28: #{tpu_custom_call.1} parent=23 // pred_fallthru
        _
    $region24: #{tpu_custom_call.1} parent=5 // pred_fallthru
      _
    %p137 = scmp.le.s32.totalorder 1, %s9
    %p138 = scmp.lt.s32.totalorder %s9, 8
    %p139 = pnand %p137, %p138
    %p140 = pneg %p139
    // Predicated region
    $region29: #{tpu_custom_call.1} parent=5 // pred_check
      _
    $region30: #{tpu_custom_call.1} parent=5 // pred_check_branch
      %142 = sbr.rel (%p139) target = $region32
    $region31: #{tpu_custom_call.1} parent=5 // pred_region
      %s143 = ssub.s32 %s9, 1
      %s144 = smul.u32 28, %s14
      %p145 = scmp.lt.s32.totalorder %s144, 195
      %s146 = scalar_select %p145, %s144, 195
      %s147 = smul.addr %s146, 4
      %s148 = scalar_lea.vmem %s0, %s147
      %p149 = pneg %p35
      %p150 = pneg %p32
      %p151 = pneg %p56
      %p152 = pneg %p53
      %p153 = pneg %p77
      %p154 = pneg %p74
      %p155 = pneg %p103
      %p156 = pneg %p100
      %s157 = smul.u32 28, %s14
      %p158 = scmp.lt.s32.totalorder %s157, 195
      %s159 = scalar_select %p158, %s157, 195
      %s160 = smul.addr %s159, 4
      %s161 = scalar_lea.vmem %s3, %s160
      %s162 = smul.u32 28, %s14
      %p163 = scmp.lt.s32.totalorder %s162, 195
      %s164 = scalar_select %p163, %s162, 195
      %s165 = smul.addr %s164, 4
      %s166 = scalar_lea.vmem %s0, %s165
      %s167 = smul.u32 28, %s14
      %s168 = smul.u32 28, %s14
      %p169 = scmp.lt.s32.totalorder %s168, 195
      %s170 = scalar_select %p169, %s168, 195
      %s171 = smul.addr %s170, 4
      %s172 = scalar_lea.vmem %s3, %s171
      %s173 = smul.u32 28, %s14
      %v175 = vld [vmem:[%s166] sm:$0xf]
      %v176 = vld [vmem:[%s166 + $0x4] sm:$0xf]
      %v177 = vld [vmem:[%s166 + $0x8] sm:$0xf]
      %v178 = vld [vmem:[%s166 + $0xc] sm:$0xf]
      %v179 = vld [vmem:[%s166 + $0x10] sm:$0xf]
      %v180 = vld [vmem:[%s166 + $0x14] sm:$0xf]
      %v181 = vld [vmem:[%s166 + $0x18] sm:$0xf]
      %v182 = vld [vmem:[%s166 + $0x1c] sm:$0xf]
      %v183 = vld [vmem:[%s166 + $0x20] sm:$0xf]
      %v184 = vld [vmem:[%s166 + $0x24] sm:$0xf]
      %v185 = vld [vmem:[%s166 + $0x28] sm:$0xf]
      %v186 = vld [vmem:[%s166 + $0x2c] sm:$0xf]
      %v187 = vld [vmem:[%s166 + $0x30] sm:$0xf]
      %v188 = vld [vmem:[%s166 + $0x34] sm:$0xf]
      %v189 = vld [vmem:[%s166 + $0x38] sm:$0xf]
      %v190 = vld [vmem:[%s166 + $0x3c] sm:$0xf]
      %v191 = vld [vmem:[%s166 + $0x40] sm:$0xf]
      %v192 = vld [vmem:[%s166 + $0x44] sm:$0xf]
      %v193 = vld [vmem:[%s166 + $0x48] sm:$0xf]
      %v194 = vld [vmem:[%s166 + $0x4c] sm:$0xf]
      %v195 = vld [vmem:[%s166 + $0x50] sm:$0xf]
      %v196 = vld [vmem:[%s166 + $0x54] sm:$0xf]
      %v197 = vld [vmem:[%s166 + $0x58] sm:$0xf]
      %v198 = vld [vmem:[%s166 + $0x5c] sm:$0xf]
      %v199 = vld [vmem:[%s166 + $0x60] sm:$0xf]
      %v200 = vld [vmem:[%s166 + $0x64] sm:$0xf]
      %v201 = vld [vmem:[%s166 + $0x68] sm:$0xf]
      %v202 = vld [vmem:[%s166 + $0x6c] sm:$0xf]
      %v203 = vld [vmem:[%s1] sm:$0xf]
      %v204 = vld [vmem:[%s1 + $0x4] sm:$0x1]
      %v205 = vld [vmem:[%s2] sm:$0x1]
      %v207 = vlaneseq
      %v208 = vshrl.u32 %v207, 7
      %v209 = vsub.s32 0, %v208
      %v210 = vrot.slane %v205, %v209
      %v240 = vunpack.c.l.b16 %v175
      %v241 = vunpack.c.l.b16 %v176
      %v242 = vunpack.c.l.b16 %v177
      %v243 = vunpack.c.l.b16 %v178
      %v244 = vunpack.c.l.b16 %v179
      %v245 = vunpack.c.l.b16 %v180
      %v246 = vunpack.c.l.b16 %v181
      %v247 = vunpack.c.l.b16 %v182
      %v248 = vunpack.c.l.b16 %v183
      %v249 = vunpack.c.l.b16 %v184
      %v250 = vunpack.c.l.b16 %v185
      %v251 = vunpack.c.l.b16 %v186
      %v252 = vunpack.c.l.b16 %v187
      %v253 = vunpack.c.l.b16 %v188
      %v254 = vunpack.c.l.b16 %v189
      %v255 = vunpack.c.l.b16 %v190
      %v256 = vunpack.c.l.b16 %v191
      %v257 = vunpack.c.l.b16 %v192
      %v258 = vunpack.c.l.b16 %v193
      %v259 = vunpack.c.l.b16 %v194
      %v260 = vunpack.c.l.b16 %v195
      %v261 = vunpack.c.l.b16 %v196
      %v262 = vunpack.c.l.b16 %v197
      %v263 = vunpack.c.l.b16 %v198
      %v264 = vunpack.c.l.b16 %v199
      %v265 = vunpack.c.l.b16 %v200
      %v266 = vunpack.c.l.b16 %v201
      %v267 = vunpack.c.l.b16 %v202
      %v268 = vpack.c.b16 %v241, %v240
      %v269 = vpack.c.b16 %v243, %v242
      %v270 = vpack.c.b16 %v245, %v244
      %v271 = vpack.c.b16 %v247, %v246
      %v272 = vpack.c.b16 %v249, %v248
      %v273 = vpack.c.b16 %v251, %v250
      %v274 = vpack.c.b16 %v253, %v252
      %v275 = vpack.c.b16 %v255, %v254
      %v276 = vpack.c.b16 %v257, %v256
      %v277 = vpack.c.b16 %v259, %v258
      %v278 = vpack.c.b16 %v261, %v260
      %v279 = vpack.c.b16 %v263, %v262
      %v280 = vpack.c.b16 %v265, %v264
      %v281 = vpack.c.b16 %v267, %v266
      %v284 = vunpack.c.l.b16 %v203
      %v285 = vunpack.c.l.b16 %v204
      %v286 = vpack.c.b16 %v285, %v284
      %vm287 = vcmask 72704
      %v289 = vsel %vm287, %v268, 0
      %v292 = vsel %vm287, %v269, 0
      %v295 = vsel %vm287, %v270, 0
      %v298 = vsel %vm287, %v271, 0
      %v301 = vsel %vm287, %v272, 0
      %v304 = vsel %vm287, %v273, 0
      %v307 = vsel %vm287, %v274, 0
      %v310 = vsel %vm287, %v275, 0
      %v313 = vsel %vm287, %v276, 0
      %v316 = vsel %vm287, %v277, 0
      %v319 = vsel %vm287, %v278, 0
      %v322 = vsel %vm287, %v279, 0
      %v325 = vsel %vm287, %v280, 0
      %v328 = vsel %vm287, %v281, 0
      %vm330 = vcmask 1043456
      %vm331 = vcmask 1044480
      %v332 = vsel %vm330, 4294967295, 65535
      %v333 = vsel %vm331, %v332, 0
      %v335 = vand.u32 %v286, %v333
      %337 = vmatprep.subr.bf16.mxu0 0
      %338 = vmatpush1.bf16.msra.mxu0 %v335
      %339 = vmatprep.subr.bf16.mxu0 0
      %340 = vmatpush1.bf16.msra.mxu0 0
      %341 = vmatprep.subr.bf16.mxu0 0
      %342 = vmatpush1.bf16.msra.mxu0 0
      %343 = vmatprep.subr.bf16.mxu0 0
      %344 = vmatpush1.bf16.msra.mxu0 0
      %345 = vmatprep.subr.bf16.mxu0 0
      %346 = vmatpush1.bf16.msra.mxu0 0
      %347 = vmatprep.subr.bf16.mxu0 0
      %348 = vmatpush1.bf16.msra.mxu0 0
      %349 = vmatprep.subr.bf16.mxu0 0
      %350 = vmatpush1.bf16.msra.mxu0 0
      %351 = vmatprep.subr.bf16.mxu0 0
      %352 = vmatpush1.bf16.msra.mxu0 0
      %353 = vmatprep.subr.bf16.mxu0 0
      %354 = vmatpush1.bf16.msra.mxu0 0
      %355 = vmatprep.subr.bf16.mxu0 0
      %356 = vmatpush1.bf16.msra.mxu0 0
      %357 = vmatprep.subr.bf16.mxu0 0
      %358 = vmatpush1.bf16.msra.mxu0 0
      %359 = vmatprep.subr.bf16.mxu0 0
      %360 = vmatpush1.bf16.msra.mxu0 0
      %361 = vmatprep.subr.bf16.mxu0 0
      %362 = vmatpush1.bf16.msra.mxu0 0
      %363 = vmatprep.subr.bf16.mxu0 0
      %364 = vmatpush1.bf16.msra.mxu0 0
      %365 = vmatprep.subr.bf16.mxu0 0
      %366 = vmatpush1.bf16.msra.mxu0 0
      %367 = vmatprep.subr.bf16.mxu0 0
      %368 = vmatpush1.bf16.msra.mxu0 0
      %369 = vmatprep.mubr.bf16.mxu0 0
      %370 = vmatmul.mubr.bf16.gmra.mrb[0].mxu0 %v289
      %v371 = vpop.f32.mrb[0].mxu0
      %v372 = vadd.f32 %v210, %v371
      %v373 = vpop.f32.mrb[0].mxu0
      %v374 = vpop.f32.mrb[0].mxu0
      %v375 = vadd.f32 %v210, %v374
      %v376 = vpop.f32.mrb[0].mxu0
      %377 = vmatprep.mubr.bf16.mxu0 0
      %378 = vmatmul.mubr.bf16.gmra.mrb[0].mxu0 %v292
      %v379 = vpop.f32.mrb[0].mxu0
      %v380 = vadd.f32 %v210, %v379
      %v381 = vpop.f32.mrb[0].mxu0
      %v382 = vpop.f32.mrb[0].mxu0
      %v383 = vadd.f32 %v210, %v382
      %v384 = vpop.f32.mrb[0].mxu0
      %385 = vmatprep.mubr.bf16.mxu0 0
      %386 = vmatmul.mubr.bf16.gmra.mrb[0].mxu0 %v295
      %v387 = vpop.f32.mrb[0].mxu0
      %v388 = vadd.f32 %v210, %v387
      %v389 = vpop.f32.mrb[0].mxu0
      %v390 = vpop.f32.mrb[0].mxu0
      %v391 = vadd.f32 %v210, %v390
      %v392 = vpop.f32.mrb[0].mxu0
      %393 = vmatprep.mubr.bf16.mxu0 0
      %394 = vmatmul.mubr.bf16.gmra.mrb[0].mxu0 %v298
      %v395 = vpop.f32.mrb[0].mxu0
      %v396 = vadd.f32 %v210, %v395
      %v397 = vpop.f32.mrb[0].mxu0
      %v398 = vpop.f32.mrb[0].mxu0
      %v399 = vadd.f32 %v210, %v398
      %v400 = vpop.f32.mrb[0].mxu0
      %401 = vmatprep.mubr.bf16.mxu0 0
      %402 = vmatmul.mubr.bf16.gmra.mrb[0].mxu0 %v301
      %v403 = vpop.f32.mrb[0].mxu0
      %v404 = vadd.f32 %v210, %v403
      %v405 = vpop.f32.mrb[0].mxu0
      %v406 = vpop.f32.mrb[0].mxu0
      %v407 = vadd.f32 %v210, %v406
      %v408 = vpop.f32.mrb[0].mxu0
      %409 = vmatprep.mubr.bf16.mxu0 0
      %410 = vmatmul.mubr.bf16.gmra.mrb[0].mxu0 %v304
      %v411 = vpop.f32.mrb[0].mxu0
      %v412 = vadd.f32 %v210, %v411
      %v413 = vpop.f32.mrb[0].mxu0
      %v414 = vpop.f32.mrb[0].mxu0
      %v415 = vadd.f32 %v210, %v414
      %v416 = vpop.f32.mrb[0].mxu0
      %417 = vmatprep.mubr.bf16.mxu0 0
      %418 = vmatmul.mubr.bf16.gmra.mrb[0].mxu0 %v307
      %v419 = vpop.f32.mrb[0].mxu0
      %v420 = vadd.f32 %v210, %v419
      %v421 = vpop.f32.mrb[0].mxu0
      %v422 = vpop.f32.mrb[0].mxu0
      %v423 = vadd.f32 %v210, %v422
      %v424 = vpop.f32.mrb[0].mxu0
      %425 = vmatprep.mubr.bf16.mxu0 0
      %426 = vmatmul.mubr.bf16.gmra.mrb[0].mxu0 %v310
      %v427 = vpop.f32.mrb[0].mxu0
      %v428 = vadd.f32 %v210, %v427
      %v429 = vpop.f32.mrb[0].mxu0
      %v430 = vpop.f32.mrb[0].mxu0
      %v431 = vadd.f32 %v210, %v430
      %v432 = vpop.f32.mrb[0].mxu0
      %433 = vmatprep.mubr.bf16.mxu0 0
      %434 = vmatmul.mubr.bf16.gmra.mrb[0].mxu0 %v313
      %v435 = vpop.f32.mrb[0].mxu0
      %v436 = vadd.f32 %v210, %v435
      %v437 = vpop.f32.mrb[0].mxu0
      %v438 = vpop.f32.mrb[0].mxu0
      %v439 = vadd.f32 %v210, %v438
      %v440 = vpop.f32.mrb[0].mxu0
      %441 = vmatprep.mubr.bf16.mxu0 0
      %442 = vmatmul.mubr.bf16.gmra.mrb[0].mxu0 %v316
      %v443 = vpop.f32.mrb[0].mxu0
      %v444 = vadd.f32 %v210, %v443
      %v445 = vpop.f32.mrb[0].mxu0
      %v446 = vpop.f32.mrb[0].mxu0
      %v447 = vadd.f32 %v210, %v446
      %v448 = vpop.f32.mrb[0].mxu0
      %449 = vmatprep.mubr.bf16.mxu0 0
      %450 = vmatmul.mubr.bf16.gmra.mrb[0].mxu0 %v319
      %v451 = vpop.f32.mrb[0].mxu0
      %v452 = vadd.f32 %v210, %v451
      %v453 = vpop.f32.mrb[0].mxu0
      %v454 = vpop.f32.mrb[0].mxu0
      %v455 = vadd.f32 %v210, %v454
      %v456 = vpop.f32.mrb[0].mxu0
      %457 = vmatprep.mubr.bf16.mxu0 0
      %458 = vmatmul.mubr.bf16.gmra.mrb[0].mxu0 %v322
      %v459 = vpop.f32.mrb[0].mxu0
      %v460 = vadd.f32 %v210, %v459
      %v461 = vpop.f32.mrb[0].mxu0
      %v462 = vpop.f32.mrb[0].mxu0
      %v463 = vadd.f32 %v210, %v462
      %v464 = vpop.f32.mrb[0].mxu0
      %465 = vmatprep.mubr.bf16.mxu0 0
      %466 = vmatmul.mubr.bf16.gmra.mrb[0].mxu0 %v325
      %v467 = vpop.f32.mrb[0].mxu0
      %v468 = vadd.f32 %v210, %v467
      %v469 = vpop.f32.mrb[0].mxu0
      %v470 = vpop.f32.mrb[0].mxu0
      %v471 = vadd.f32 %v210, %v470
      %v472 = vpop.f32.mrb[0].mxu0
      %473 = vmatprep.mubr.bf16.mxu0 0
      %474 = vmatmul.mubr.bf16.gmra.mrb[0].mxu0 %v328
      %v475 = vpop.f32.mrb[0].mxu0
      %v476 = vadd.f32 %v210, %v475
      %v477 = vpop.f32.mrb[0].mxu0
      %v478 = vpop.f32.mrb[0].mxu0
      %v479 = vadd.f32 %v210, %v478
      %v480 = vpop.f32.mrb[0].mxu0
      %481 = vdwg.mxu0
      %v482 = vmax.f32 %v372, 0.0
      %v483 = vmax.f32 %v375, 0.0
      %v484 = vmax.f32 %v380, 0.0
      %v485 = vmax.f32 %v383, 0.0
      %v486 = vmax.f32 %v388, 0.0
      %v487 = vmax.f32 %v391, 0.0
      %v488 = vmax.f32 %v396, 0.0
      %v489 = vmax.f32 %v399, 0.0
      %v490 = vmax.f32 %v404, 0.0
      %v491 = vmax.f32 %v407, 0.0
      %v492 = vmax.f32 %v412, 0.0
      %v493 = vmax.f32 %v415, 0.0
      %v494 = vmax.f32 %v420, 0.0
      %v495 = vmax.f32 %v423, 0.0
      %v496 = vmax.f32 %v428, 0.0
      %v497 = vmax.f32 %v431, 0.0
      %v498 = vmax.f32 %v436, 0.0
      %v499 = vmax.f32 %v439, 0.0
      %v500 = vmax.f32 %v444, 0.0
      %v501 = vmax.f32 %v447, 0.0
      %v502 = vmax.f32 %v452, 0.0
      %v503 = vmax.f32 %v455, 0.0
      %v504 = vmax.f32 %v460, 0.0
      %v505 = vmax.f32 %v463, 0.0
      %v506 = vmax.f32 %v468, 0.0
      %v507 = vmax.f32 %v471, 0.0
      %v508 = vmax.f32 %v476, 0.0
      %v509 = vmax.f32 %v479, 0.0
      %v510 = vpack.c.bf16 %v483, %v482
      %v511 = vpack.c.bf16 %v485, %v484
      %v512 = vpack.c.bf16 %v487, %v486
      %v513 = vpack.c.bf16 %v489, %v488
      %v514 = vpack.c.bf16 %v491, %v490
      %v515 = vpack.c.bf16 %v493, %v492
      %v516 = vpack.c.bf16 %v495, %v494
      %v517 = vpack.c.bf16 %v497, %v496
      %v518 = vpack.c.bf16 %v499, %v498
      %v519 = vpack.c.bf16 %v501, %v500
      %v520 = vpack.c.bf16 %v503, %v502
      %v521 = vpack.c.bf16 %v505, %v504
      %v522 = vpack.c.bf16 %v507, %v506
      %v523 = vpack.c.bf16 %v509, %v508
      %v538 = vunpack.c.l.b16 %v510
      %v539 = vunpack.c.h.b16 %v510
      %v540 = vunpack.c.l.b16 %v511
      %v541 = vunpack.c.h.b16 %v511
      %v542 = vunpack.c.l.b16 %v512
      %v543 = vunpack.c.h.b16 %v512
      %v544 = vunpack.c.l.b16 %v513
      %v545 = vunpack.c.h.b16 %v513
      %v546 = vunpack.c.l.b16 %v514
      %v547 = vunpack.c.h.b16 %v514
      %v548 = vunpack.c.l.b16 %v515
      %v549 = vunpack.c.h.b16 %v515
      %v550 = vunpack.c.l.b16 %v516
      %v551 = vunpack.c.h.b16 %v516
      %v552 = vunpack.c.l.b16 %v517
      %v553 = vunpack.c.h.b16 %v517
      %v554 = vunpack.c.l.b16 %v518
      %v555 = vunpack.c.h.b16 %v518
      %v556 = vunpack.c.l.b16 %v519
      %v557 = vunpack.c.h.b16 %v519
      %v558 = vunpack.c.l.b16 %v520
      %v559 = vunpack.c.h.b16 %v520
      %v560 = vunpack.c.l.b16 %v521
      %v561 = vunpack.c.h.b16 %v521
      %v562 = vunpack.c.l.b16 %v522
      %v563 = vunpack.c.h.b16 %v522
      %v564 = vunpack.c.l.b16 %v523
      %v565 = vunpack.c.h.b16 %v523
      %v566 = vpack.c.b16 %v538, %v538
      %v567 = vpack.c.b16 %v539, %v539
      %v568 = vpack.c.b16 %v540, %v540
      %v569 = vpack.c.b16 %v541, %v541
      %v570 = vpack.c.b16 %v542, %v542
      %v571 = vpack.c.b16 %v543, %v543
      %v572 = vpack.c.b16 %v544, %v544
      %v573 = vpack.c.b16 %v545, %v545
      %v574 = vpack.c.b16 %v546, %v546
      %v575 = vpack.c.b16 %v547, %v547
      %v576 = vpack.c.b16 %v548, %v548
      %v577 = vpack.c.b16 %v549, %v549
      %v578 = vpack.c.b16 %v550, %v550
      %v579 = vpack.c.b16 %v551, %v551
      %v580 = vpack.c.b16 %v552, %v552
      %v581 = vpack.c.b16 %v553, %v553
      %v582 = vpack.c.b16 %v554, %v554
      %v583 = vpack.c.b16 %v555, %v555
      %v584 = vpack.c.b16 %v556, %v556
      %v585 = vpack.c.b16 %v557, %v557
      %v586 = vpack.c.b16 %v558, %v558
      %v587 = vpack.c.b16 %v559, %v559
      %v588 = vpack.c.b16 %v560, %v560
      %v589 = vpack.c.b16 %v561, %v561
      %v590 = vpack.c.b16 %v562, %v562
      %v591 = vpack.c.b16 %v563, %v563
      %v592 = vpack.c.b16 %v564, %v564
      %v593 = vpack.c.b16 %v565, %v565
      %vm622 = vcmask 519168
      %623 = vst.msk [vmem:[%s172] sm:$0xf] %vm622, %v566
      %624 = vst.msk [vmem:[%s172 + $0x4] sm:$0xf] %vm622, %v567
      %625 = vst.msk [vmem:[%s172 + $0x8] sm:$0xf] %vm622, %v568
      %626 = vst.msk [vmem:[%s172 + $0xc] sm:$0xf] %vm622, %v569
      %627 = vst.msk [vmem:[%s172 + $0x10] sm:$0xf] %vm622, %v570
      %628 = vst.msk [vmem:[%s172 + $0x14] sm:$0xf] %vm622, %v571
      %629 = vst.msk [vmem:[%s172 + $0x18] sm:$0xf] %vm622, %v572
      %630 = vst.msk [vmem:[%s172 + $0x1c] sm:$0xf] %vm622, %v573
      %631 = vst.msk [vmem:[%s172 + $0x20] sm:$0xf] %vm622, %v574
      %632 = vst.msk [vmem:[%s172 + $0x24] sm:$0xf] %vm622, %v575
      %633 = vst.msk [vmem:[%s172 + $0x28] sm:$0xf] %vm622, %v576
      %634 = vst.msk [vmem:[%s172 + $0x2c] sm:$0xf] %vm622, %v577
      %635 = vst.msk [vmem:[%s172 + $0x30] sm:$0xf] %vm622, %v578
      %636 = vst.msk [vmem:[%s172 + $0x34] sm:$0xf] %vm622, %v579
      %637 = vst.msk [vmem:[%s172 + $0x38] sm:$0xf] %vm622, %v580
      %638 = vst.msk [vmem:[%s172 + $0x3c] sm:$0xf] %vm622, %v581
      %639 = vst.msk [vmem:[%s172 + $0x40] sm:$0xf] %vm622, %v582
      %640 = vst.msk [vmem:[%s172 + $0x44] sm:$0xf] %vm622, %v583
      %641 = vst.msk [vmem:[%s172 + $0x48] sm:$0xf] %vm622, %v584
      %642 = vst.msk [vmem:[%s172 + $0x4c] sm:$0xf] %vm622, %v585
      %643 = vst.msk [vmem:[%s172 + $0x50] sm:$0xf] %vm622, %v586
      %644 = vst.msk [vmem:[%s172 + $0x54] sm:$0xf] %vm622, %v587
      %645 = vst.msk [vmem:[%s172 + $0x58] sm:$0xf] %vm622, %v588
      %646 = vst.msk [vmem:[%s172 + $0x5c] sm:$0xf] %vm622, %v589
      %647 = vst.msk [vmem:[%s172 + $0x60] sm:$0xf] %vm622, %v590
      %648 = vst.msk [vmem:[%s172 + $0x64] sm:$0xf] %vm622, %v591
      %649 = vst.msk [vmem:[%s172 + $0x68] sm:$0xf] %vm622, %v592
      %650 = vst.msk [vmem:[%s172 + $0x6c] sm:$0xf] %vm622, %v593
      %s651 = smul.u32 28, %s14
      %p652 = scmp.lt.s32.totalorder %s651, 195
      %s653 = scalar_select %p652, %s651, 195
      %s654 = smul.addr %s653, 4
      %s655 = scalar_lea.vmem %s3, %s654
      // Predicated region
      $region33: #{tpu_custom_call.1} parent=31 // pred_check
        %p656 = pneg %p100
      $region34: #{tpu_custom_call.1} parent=31 // pred_check_branch
        %658 = sbr.rel (%p656) target = $region36
      $region35: #{tpu_custom_call.1} parent=31 // pred_region
        %s659 = smul.u32 28, %s14
      $region36: #{tpu_custom_call.1} parent=31 // pred_fallthru
        _
    $region32: #{tpu_custom_call.1} parent=5 // pred_fallthru
      _
    %p660 = scmp.le.s32.totalorder 2, %s9
    // Predicated region
    $region37: #{tpu_custom_call.1} parent=5 // pred_check
      %p661 = pneg %p660
    $region38: #{tpu_custom_call.1} parent=5 // pred_check_branch
      %663 = sbr.rel (%p661) target = $region40
    $region39: #{tpu_custom_call.1} parent=5 // pred_region
      %s664 = ssub.s32 %s9, 2
      // Predicated region
      $region41: #{tpu_custom_call.1} parent=39 // pred_check
        %p665 = pneg %p106
      $region42: #{tpu_custom_call.1} parent=39 // pred_check_branch
        %667 = sbr.rel (%p665) target = $region44
      $region43: #{tpu_custom_call.1} parent=39 // pred_region
        %s668 = smul.u32 28, %s15
        %p669 = scmp.lt.s32.totalorder %s668, 195
        %s670 = scalar_select %p669, %s668, 195
        %s671 = smul.addr %s670, 4
        %s672 = scalar_lea.vmem %s3, %s671
      $region44: #{tpu_custom_call.1} parent=39 // pred_fallthru
        _
    $region40: #{tpu_custom_call.1} parent=5 // pred_fallthru
      _
  $region6: #{tpu_custom_call.1} parent=0 // loop_footer
    %s13 = sadd.s32 1, %s9
  $region7: #{tpu_custom_call.1} parent=0 // loop_footer_branch
    %8 = sbr.rel target = $region3
  $region8: #{tpu_custom_call.1} parent=0 // loop_exit
    _

</llo_original>
